<compile_context>
chip_gen: v5e
topology: v5e:2x2
jax: 0.10.0
libtpu: 0.0.40
codegen_flags: <defaults>
</compile_context>

<pallas_src>
import functools

import jax
import jax.numpy as jnp
from jax.experimental import pallas as pl
from jax.experimental.pallas import tpu as pltpu

_INV_SQRT2 = 0.7071067811865476


# --------------------------------------------------------------------------- #
# Helpers
# --------------------------------------------------------------------------- #
def _vmem_cap_bytes():
    """Per-core VMEM capacity (v5e/v6e: 128 MiB, v7x: 64 MiB)."""
    try:
        return int(pltpu.get_tpu_info().vmem_capacity_bytes)
    except Exception:          # pragma: no cover - be conservative if query fails
        return 64 * 1024 * 1024


def _pick_rows(M, per_row_bytes, vmem_budget, max_rows, sublane=8):
    """Row-tile size: sublane-aligned, VMEM-fitting, and targeting >=2 grid
    steps so a 'parallel' row grid can shard across both v7x TensorCores."""
    if M <= sublane:
        return M
    fit = int(vmem_budget * 0.8) // max(per_row_bytes, 1)
    fit = max(sublane, (fit // sublane) * sublane)
    tm = min(max_rows, fit)
    half = -(-M // 2)                               # cdiv(M, 2)
    half = -(-half // sublane) * sublane            # round up to sublane
    return max(sublane, min(tm, half))


def _pack_bin_table(bin_lo, bin_hi, bin_scaling):
    """Pack (lo, hi, scale) into one lane-dense (3, >=128) f32 table.

    Padding uses lo=2, hi=3, scale=0 so padded bins never match and contribute
    zero to the masked sum."""
    B = bin_lo.reshape(-1).shape[0]
    width = max(128, -(-B // 128) * 128)
    lo = jnp.full((1, width), 2.0, jnp.float32).at[0, :B].set(
        bin_lo.reshape(-1).astype(jnp.float32))
    hi = jnp.full((1, width), 3.0, jnp.float32).at[0, :B].set(
        bin_hi.reshape(-1).astype(jnp.float32))
    sc = jnp.zeros((1, width), jnp.float32).at[0, :B].set(
        bin_scaling.reshape(-1).astype(jnp.float32))
    return jnp.concatenate([lo, hi, sc], axis=0)


def _bin_scale(base, tbl):
    """base * bin_scaling[bin(base)] as a masked sum (bins are disjoint, so
    this equals the PyTorch scatter-assign; base exactly on an interior
    boundary goes to the upper bin, and base outside every bin -> 0, both
    matching the reference loop)."""
    lo = tbl[0:1, :]
    hi = tbl[1:2, :]
    sc = tbl[2:3, :]
    in_bin = (base >= lo) & (base < hi)
    return base * jnp.sum(jnp.where(in_bin, sc, 0.0), axis=-1, keepdims=True)


# --------------------------------------------------------------------------- #
# Kernel: branch 1, fused fast path (MLP algebraically eliminated)
# --------------------------------------------------------------------------- #
def _calib_fused_kernel(x_ref, tbl_ref, o_ref):
    x = x_ref[...].astype(jnp.float32)                         # (TM, H)
    mean_x = jnp.mean(x, axis=-1, keepdims=True)               # (TM, 1)
    base = 1.0 / (1.0 + jnp.exp(-mean_x))                      # sigmoid
    calibrated = _bin_scale(base, tbl_ref[...])
    # sum(calibrated * softmax(...), -1) == calibrated, so this is the answer.
    o_ref[...] = jnp.clip(calibrated, 0.0, 1.0).astype(o_ref.dtype)


# --------------------------------------------------------------------------- #
# Kernel: branch 1, faithful full calibration network (optional)
# --------------------------------------------------------------------------- #
def _calib_net_kernel(x_ref, w1_ref, b1_ref, gamma_ref, beta_ref,
                      w2_ref, b2_ref, tbl_ref, o_ref, *, eps):
    x = x_ref[...].astype(jnp.float32)                         # (TM, H)

    mean_x = jnp.mean(x, axis=-1, keepdims=True)
    base = 1.0 / (1.0 + jnp.exp(-mean_x))                      # sigmoid(mean)

    # Linear(H -> H/2): bf16 operands, f32 accumulation (MXU-native).
    h = jnp.dot(x.astype(jnp.bfloat16), w1_ref[...],
                preferred_element_type=jnp.float32) + b1_ref[...]

    # LayerNorm(H/2), two-pass variance (avoids m2 - m*m cancellation).
    m = jnp.mean(h, axis=-1, keepdims=True)
    c = h - m
    var = jnp.mean(c * c, axis=-1, keepdims=True)
    ln = c * jax.lax.rsqrt(var + eps) * gamma_ref[...] + beta_ref[...]

    # tanh-approx GELU: tanh runs on the EUP slot instead of the long erf VPU
    # polynomial that saturates the VALU at moderate H.  The tiny numerical
    # difference cancels in the output because bin_weights sums to 1.
    g = jax.nn.gelu(ln, approximate=True)
    # TODO(synk): Dropout(0.1) is identity here (eval/inference semantics);
    # training-mode dropout would need pltpu.prng_seed / pltpu.prng_random_bits.

    # Linear(H/2 -> num_bins) + softmax over bins.
    logits = jnp.dot(g.astype(jnp.bfloat16), w2_ref[...],
                     preferred_element_type=jnp.float32) + b2_ref[...]
    z = logits - jnp.max(logits, axis=-1, keepdims=True)
    e = jnp.exp(z)
    bin_weights = e / jnp.sum(e, axis=-1, keepdims=True)

    calibrated = _bin_scale(base, tbl_ref[...])
    final = jnp.sum(calibrated * bin_weights, axis=-1, keepdims=True)
    o_ref[...] = jnp.clip(final, 0.0, 1.0).astype(o_ref.dtype)


def confidence_calibration(x, params, *, eps=1e-5, use_network=False,
                           block_rows=None):
    """input_size branch of ConfidenceCalibration.forward (eval mode)."""
    orig_shape = x.shape
    H = orig_shape[-1]
    x2d = x.reshape(-1, H)
    M = x2d.shape[0]
    itemsize = x2d.dtype.itemsize
    sublane = 8 * max(1, 4 // itemsize)

    tbl = _pack_bin_table(params["bin_lo"], params["bin_hi"],
                          params["bin_scaling"])
    Bp = tbl.shape[-1]

    vmem_budget = (_vmem_cap_bytes() * 3) // 4        # headroom for Mosaic scratch

    if not use_network:
        # ---- fast path: no matmuls, no resident weights ---------------------
        per_row = 2 * (H * itemsize + 4) + 4 * H + 2 * Bp * 4
        TM = _pick_rows(M, per_row, vmem_budget,
                        1024 if block_rows is None else block_rows, sublane)
        grid = (pl.cdiv(M, TM),)
        need = TM * per_row + 2 * 3 * Bp * 4 + (1 << 20)
        cost = pl.CostEstimate(
            flops=M * (H + Bp + 8),
            transcendentals=M,
            bytes_accessed=x2d.size * itemsize + M * 4 + 3 * Bp * 4)
        out = pl.pallas_call(
            _calib_fused_kernel,
            out_shape=jax.ShapeDtypeStruct((M, 1), jnp.float32),
            grid=grid,
            in_specs=[pl.BlockSpec((TM, H), lambda i: (i, 0)),
                      pl.BlockSpec((3, Bp), lambda i: (0, 0))],
            out_specs=pl.BlockSpec((TM, 1), lambda i: (i, 0)),
            compiler_params=pltpu.CompilerParams(
                dimension_semantics=("parallel",),
                vmem_limit_bytes=min(vmem_budget, max(32 << 20, int(need * 1.5)))),
            cost_estimate=cost,
        )(x2d, tbl)
        return out.reshape(orig_shape[:-1])

    # ---- faithful path: full calibration network ----------------------------
    w1, w2 = params["w1"], params["w2"]
    H2, B = w1.shape[1], w2.shape[1]

    # Resident blocks are double-buffered by the pipeline even with a constant
    # index_map -> budget them at 2x.
    w_resident = 2 * (w1.size * w1.dtype.itemsize + w2.size * w2.dtype.itemsize
                      + (4 * H2 + 2 * B) * 4 + 3 * Bp * 4)
    per_row = (2 * (H * itemsize + 4)                 # double-buffered x + out
               + 4 * H                                # f32 upcast of x
               + 6 * max(H2, 128) * 4                 # h / c / ln / g + bf16 copy
               + 2 * max(B, 128) * 4)                 # logits / bin_weights
    # TODO(synk): if w_resident alone outgrows the budget (very large H),
    # stream w1 from HBM (memory_space=pl.ANY + pltpu.emit_pipeline).
    TM = _pick_rows(M, per_row, max(vmem_budget - w_resident, 1 << 20),
                    512 if block_rows is None else block_rows, sublane)
    grid = (pl.cdiv(M, TM),)
    need = w_resident + TM * per_row + (2 << 20)
    cost = pl.CostEstimate(
        flops=2 * M * H * H2 + 2 * M * H2 * B + 10 * M * H2,
        transcendentals=M * (H2 + B + 2),
        bytes_accessed=(x2d.size * itemsize + M * 4
                        + w1.size * w1.dtype.itemsize
                        + w2.size * w2.dtype.itemsize
                        + (4 * H2 + 2 * B) * 4 + 3 * Bp * 4))

    def resident(r, c):
        # Same block index every grid step -> DMA'd once, stays VMEM-resident.
        return pl.BlockSpec((r, c), lambda i: (0, 0))

    out = pl.pallas_call(
        functools.partial(_calib_net_kernel, eps=eps),
        out_shape=jax.ShapeDtypeStruct((M, 1), jnp.float32),
        grid=grid,
        in_specs=[pl.BlockSpec((TM, H), lambda i: (i, 0)),
                  resident(H, H2), resident(1, H2),
                  resident(1, H2), resident(1, H2),
                  resident(H2, B), resident(1, B),
                  resident(3, Bp)],
        out_specs=pl.BlockSpec((TM, 1), lambda i: (i, 0)),
        compiler_params=pltpu.CompilerParams(
            dimension_semantics=("parallel",),
            vmem_limit_bytes=min(vmem_budget, max(32 << 20, int(need * 1.25)))),
        cost_estimate=cost,
    )(x2d, params["w1"], params["b1"], params["gamma"], params["beta"],
      params["w2"], params["b2"], tbl)
    return out.reshape(orig_shape[:-1])


# --------------------------------------------------------------------------- #
# Kernel: temperature-scaling branch (input_size is None)
# --------------------------------------------------------------------------- #
def _temperature_kernel(temp_ref, x_ref, tbl_ref, o_ref):
    x = x_ref[...].astype(jnp.float32)                         # (TM, C)
    z = x * (1.0 / temp_ref[0, 0])
    z = z - jnp.max(z, axis=-1, keepdims=True)
    # max(softmax) == exp(0) / sum(exp(z)) after max-subtraction, so the full
    # (TM, C) normalizing divide is unnecessary.
    base = 1.0 / jnp.sum(jnp.exp(z), axis=-1, keepdims=True)   # (TM, 1)
    calibrated = _bin_scale(base, tbl_ref[...])
    o_ref[...] = jnp.clip(calibrated, 0.0, 1.0).astype(o_ref.dtype)


def confidence_calibration_temperature(x, temperature, bin_lo, bin_hi,
                                       bin_scaling, *, block_rows=None):
    orig_shape = x.shape
    C = orig_shape[-1]
    x2d = x.reshape(-1, C)
    M = x2d.shape[0]
    itemsize = x2d.dtype.itemsize
    sublane = 8 * max(1, 4 // itemsize)

    tbl = _pack_bin_table(bin_lo, bin_hi, bin_scaling)
    Bp = tbl.shape[-1]
    temp = jnp.asarray(temperature, jnp.float32).reshape(1, 1)

    vmem_budget = (_vmem_cap_bytes() * 3) // 4
    per_row = 2 * (C * itemsize + 4) + 4 * C + 2 * Bp * 4
    TM = _pick_rows(M, per_row, vmem_budget,
                    1024 if block_rows is None else block_rows, sublane)
    grid = (pl.cdiv(M, TM),)
    need = TM * per_row + 2 * 3 * Bp * 4 + (1 << 20)
    cost = pl.CostEstimate(
        flops=M * (3 * C + Bp + 8),
        transcendentals=M * C,
        bytes_accessed=x2d.size * itemsize + M * 4 + 3 * Bp * 4 + 4)

    out = pl.pallas_call(
        _temperature_kernel,
        out_shape=jax.ShapeDtypeStruct((M, 1), jnp.float32),
        grid=grid,
        in_specs=[pl.BlockSpec(memory_space=pltpu.MemorySpace.SMEM),
                  pl.BlockSpec((TM, C), lambda i: (i, 0)),
                  pl.BlockSpec((3, Bp), lambda i: (0, 0))],
        out_specs=pl.BlockSpec((TM, 1), lambda i: (i, 0)),
        compiler_params=pltpu.CompilerParams(
            dimension_semantics=("parallel",),
            vmem_limit_bytes=min(vmem_budget, max(32 << 20, int(need * 1.5)))),
        cost_estimate=cost,
    )(temp, x2d, tbl)
    return out.reshape(orig_shape[:-1])


# --------------------------------------------------------------------------- #
# Parameters + pure-JAX references (full network, erf GELU -- the spec)
# --------------------------------------------------------------------------- #
def init_params(key, input_size, num_bins=15):
    h2 = input_size // 2
    k1, k2, k3, k4 = jax.random.split(key, 4)
    lim1 = 1.0 / (input_size ** 0.5)
    lim2 = 1.0 / (h2 ** 0.5)
    # nn.Linear weight is (out, in); store transposed (in, out). bf16 for MXU.
    w1 = jax.random.uniform(k1, (input_size, h2), jnp.float32,
                            -lim1, lim1).astype(jnp.bfloat16)
    b1 = jax.random.uniform(k2, (1, h2), jnp.float32, -lim1, lim1)
    w2 = jax.random.uniform(k3, (h2, num_bins), jnp.float32,
                            -lim2, lim2).astype(jnp.bfloat16)
    b2 = jax.random.uniform(k4, (1, num_bins), jnp.float32, -lim2, lim2)
    gamma = jnp.ones((1, h2), jnp.float32)       # nn.LayerNorm init
    beta = jnp.zeros((1, h2), jnp.float32)
    boundaries = jnp.linspace(0.0, 1.0, num_bins + 1, dtype=jnp.float32)
    bin_lo = boundaries[:-1].reshape(1, num_bins)
    bin_hi = boundaries[1:].reshape(1, num_bins)
    # PyTorch initializes bin_scaling to ones; use a deterministic non-trivial
    # runtime state so the binning path is actually exercised.
    bin_scaling = jnp.linspace(0.85, 1.15, num_bins,
                               dtype=jnp.float32).reshape(1, num_bins)
    return {"w1": w1, "b1": b1, "gamma": gamma, "beta": beta,
            "w2": w2, "b2": b2,
            "bin_lo": bin_lo, "bin_hi": bin_hi, "bin_scaling": bin_scaling}


def confidence_calibration_ref(x, params, *, eps=1e-5):
    H = x.shape[-1]
    x2d = x.reshape(-1, H).astype(jnp.float32)
    w1 = params["w1"].astype(jnp.float32)
    w2 = params["w2"].astype(jnp.float32)
    h = x2d @ w1 + params["b1"]
    m = jnp.mean(h, axis=-1, keepdims=True)
    v = jnp.mean((h - m) ** 2, axis=-1, keepdims=True)
    ln = (h - m) * jax.lax.rsqrt(v + eps) * params["gamma"] + params["beta"]
    g = 0.5 * ln * (1.0 + jax.lax.erf(ln * _INV_SQRT2))      # exact GELU (spec)
    bw = jax.nn.softmax(g @ w2 + params["b2"], axis=-1)
    base = jax.nn.sigmoid(jnp.mean(x2d, axis=-1))
    lo, hi, sc = params["bin_lo"][0], params["bin_hi"][0], params["bin_scaling"][0]
    in_bin = (base[:, None] >= lo[None, :]) & (base[:, None] < hi[None, :])
    calibrated = base * jnp.sum(jnp.where(in_bin, sc[None, :], 0.0), axis=-1)
    final = jnp.sum(calibrated[:, None] * bw, axis=-1)
    return jnp.clip(final, 0.0, 1.0).reshape(x.shape[:-1])


def confidence_calibration_temperature_ref(x, temperature, bin_lo, bin_hi,
                                           bin_scaling):
    C = x.shape[-1]
    x2d = x.reshape(-1, C).astype(jnp.float32)
    p = jax.nn.softmax(x2d / temperature, axis=-1)
    base = jnp.max(p, axis=-1)
    lo, hi, sc = bin_lo[0], bin_hi[0], bin_scaling[0]
    in_bin = (base[:, None] >= lo[None, :]) & (base[:, None] < hi[None, :])
    calibrated = base * jnp.sum(jnp.where(in_bin, sc[None, :], 0.0), axis=-1)
    return jnp.clip(calibrated, 0.0, 1.0).reshape(x.shape[:-1])


# --------------------------------------------------------------------------- #
if __name__ == "__main__":
    key = jax.random.PRNGKey(0)
    kx, kp, kl = jax.random.split(key, 3)

    batch, seq, hidden, num_bins = 2, 8, 32, 15
    x = jax.random.normal(kx, (batch, seq, hidden), jnp.float32)
    params = init_params(kp, hidden, num_bins)
    ref = confidence_calibration_ref(x, params)

    # Branch 1a: fast fused kernel (network eliminated via the softmax identity).
    out_fast = jax.block_until_ready(confidence_calibration(x, params))
    assert out_fast.shape == (batch, seq)
    assert jnp.allclose(out_fast, ref, atol=1e-4, rtol=1e-4), "fused mismatch"

    # Branch 1b: faithful full-network kernel gives the same result.
    out_net = jax.block_until_ready(
        confidence_calibration(x, params, use_network=True))
    assert jnp.allclose(out_net, ref, atol=1e-4, rtol=1e-4), "net-branch mismatch"

    # bf16 activations are accepted directly (halves the dominant HBM read).
    x_bf16 = x.astype(jnp.bfloat16)
    out_bf16 = jax.block_until_ready(confidence_calibration(x_bf16, params))
    ref_bf16 = confidence_calibration_ref(x_bf16, params)
    assert jnp.allclose(out_bf16, ref_bf16, atol=1e-4, rtol=1e-4), "bf16 mismatch"

    # Branch 2: temperature scaling (input_size=None), logits over 16 classes.
    logits = jax.random.normal(kl, (batch, seq, 16), jnp.float32)
    out2 = jax.block_until_ready(confidence_calibration_temperature(
        logits, 1.5, params["bin_lo"], params["bin_hi"], params["bin_scaling"]))
    ref2 = confidence_calibration_temperature_ref(
        logits, 1.5, params["bin_lo"], params["bin_hi"], params["bin_scaling"])
    assert out2.shape == (batch, seq)
    assert jnp.allclose(out2, ref2, atol=1e-4, rtol=1e-4), "temp-branch mismatch"

    print("KERNEL_OK")
</pallas_src>

<mosaic_0001>
module attributes {stable_mosaic.version = 11 : i64} {
  func.func @_calib_fused_kernel(%arg0: i32, %arg1: memref<8x32xf32, #tpu.memory_space<vmem>>, %arg2: memref<3x128xf32, #tpu.memory_space<vmem>>, %arg3: memref<8x1xf32, #tpu.memory_space<vmem>>) attributes {dimension_semantics = [#tpu.dimension_semantics<parallel>], iteration_bounds = array<i64: 2>, scalar_prefetch = 0 : i64, scratch_operands = 0 : i64, tpu.core_type = #tpu.core_type<tc>, window_params = [{transform_indices = @transform_0, window_bounds = array<i64: 8, 32>}, {pipeline_mode = #tpu.pipeline_mode<synchronous>, transform_indices = @transform_1, window_bounds = array<i64: 3, 128>}, {transform_indices = @transform_2, window_bounds = array<i64: 8, 1>}]} {
    %c0 = arith.constant 0 : index
    %c0_0 = arith.constant 0 : index
    %0 = vector.load %arg1[%c0, %c0_0] : memref<8x32xf32, #tpu.memory_space<vmem>>, vector<8x32xf32>
    %cst = arith.constant dense<0.000000e+00> : vector<8xf32>
    %1 = vector.multi_reduction <add>, %0, %cst [1] : vector<8x32xf32> to vector<8xf32>
    %2 = vector.shape_cast %1 : vector<8xf32> to vector<8x1xf32>
    %cst_1 = arith.constant 3.200000e+01 : f32
    %3 = vector.broadcast %cst_1 : f32 to vector<8x1xf32>
    %4 = arith.divf %2, %3 : vector<8x1xf32>
    %cst_2 = arith.constant 0.000000e+00 : f32
    %5 = vector.broadcast %cst_2 : f32 to vector<8x1xf32>
    %6 = arith.subf %5, %4 : vector<8x1xf32>
    %7 = math.exp %6 : vector<8x1xf32>
    %cst_3 = arith.constant 1.000000e+00 : f32
    %8 = vector.broadcast %cst_3 : f32 to vector<8x1xf32>
    %9 = arith.addf %8, %7 : vector<8x1xf32>
    %cst_4 = arith.constant 1.000000e+00 : f32
    %10 = vector.broadcast %cst_4 : f32 to vector<8x1xf32>
    %11 = arith.divf %10, %9 : vector<8x1xf32>
    %c0_5 = arith.constant 0 : index
    %c0_6 = arith.constant 0 : index
    %12 = vector.load %arg2[%c0_5, %c0_6] : memref<3x128xf32, #tpu.memory_space<vmem>>, vector<3x128xf32>
    %13 = vector.extract_strided_slice %12 {offsets = [0, 0], sizes = [1, 128], strides = [1, 1]} : vector<3x128xf32> to vector<1x128xf32>
    %14 = vector.extract_strided_slice %12 {offsets = [1, 0], sizes = [1, 128], strides = [1, 1]} : vector<3x128xf32> to vector<1x128xf32>
    %15 = vector.extract_strided_slice %12 {offsets = [2, 0], sizes = [1, 128], strides = [1, 1]} : vector<3x128xf32> to vector<1x128xf32>
    %16 = vector.broadcast %11 : vector<8x1xf32> to vector<8x128xf32>
    %17 = vector.broadcast %13 : vector<1x128xf32> to vector<8x128xf32>
    %18 = arith.cmpf oge, %16, %17 : vector<8x128xf32>
    %19 = vector.broadcast %11 : vector<8x1xf32> to vector<8x128xf32>
    %20 = vector.broadcast %14 : vector<1x128xf32> to vector<8x128xf32>
    %21 = arith.cmpf olt, %19, %20 : vector<8x128xf32>
    %22 = arith.andi %18, %21 : vector<8x128xi1>
    %cst_7 = arith.constant 0.000000e+00 : f32
    %23 = vector.shape_cast %15 : vector<1x128xf32> to vector<1x128xf32>
    %24 = vector.broadcast %23 : vector<1x128xf32> to vector<8x128xf32>
    %25 = vector.broadcast %cst_7 : f32 to vector<8x128xf32>
    %26 = arith.select %22, %24, %25 : vector<8x128xi1>, vector<8x128xf32>
    %cst_8 = arith.constant dense<0.000000e+00> : vector<8xf32>
    %27 = vector.multi_reduction <add>, %26, %cst_8 [1] : vector<8x128xf32> to vector<8xf32>
    %28 = vector.shape_cast %27 : vector<8xf32> to vector<8x1xf32>
    %29 = arith.mulf %11, %28 : vector<8x1xf32>
    %cst_9 = arith.constant 0.000000e+00 : f32
    %cst_10 = arith.constant 1.000000e+00 : f32
    %30 = vector.broadcast %cst_9 : f32 to vector<8x1xf32>
    %31 = arith.maximumf %30, %29 : vector<8x1xf32>
    %32 = vector.broadcast %cst_10 : f32 to vector<8x1xf32>
    %33 = arith.minimumf %32, %31 : vector<8x1xf32>
    %c0_11 = arith.constant 0 : index
    %c0_12 = arith.constant 0 : index
    %34 = vector.load %arg3[%c0_11, %c0_12] : memref<8x1xf32, #tpu.memory_space<vmem>>, vector<8x1xf32>
    tpu.vector_store %arg3[%c0_11, %c0_12], %33 {strides = array<i32>} : memref<8x1xf32, #tpu.memory_space<vmem>>, vector<8x1xf32>,
    return
  }
  func.func @transform_0(%arg0: i32) -> (i32, i32) {
    %c0_i32 = arith.constant 0 : i32
    %c0_i32_0 = arith.constant 0 : i32
    return %arg0, %c0_i32 : i32, i32
  }
  func.func @transform_1(%arg0: i32) -> (i32, i32) {
    %c0_i32 = arith.constant 0 : i32
    %c0_i32_0 = arith.constant 0 : i32
    %c0_i32_1 = arith.constant 0 : i32
    return %c0_i32, %c0_i32_0 : i32, i32
  }
  func.func @transform_2(%arg0: i32) -> (i32, i32) {
    %c0_i32 = arith.constant 0 : i32
    %c0_i32_0 = arith.constant 0 : i32
    return %arg0, %c0_i32 : i32, i32
  }
}

</mosaic_0001>

<llo_original>
// kernel: tpu_custom_call.1
$region0: #{tpu_custom_call.1}
  #allocation0 [shape = 'u32[]', space=smem, size = 0x4, offset = 0x4, fixed_abs, tag = 'smem constant byte address 0x4 - core index']
  #allocation1 [shape = 'u32[72,128]{1,0:T(1,128)}', space=vmem, size = 0x9000, scoped, tag = 'internal scratch']
  %s0 = inlined_call_operand.hbm [shape: f32[16,32], index: 0, kind: input, shape index: {}]
  %s1 = inlined_call_operand.hbm [shape: f32[3,128], index: 1, kind: input, shape index: {}]
  %s2 = inlined_call_operand.vmem [shape: f32[16,1], index: 2, kind: output, shape index: {}]
  %s3 = sld [smem:[#allocation0]]
  $region49: #{tpu_custom_call.1} parent=0
    _
  %s5 = ssub.s32 1, %s3
  %s6 = scalar_select 0, %s5, %s3
  $region1: #{tpu_custom_call.1} parent=0
    #allocation2 [shape = 'u8[8192]{0}', space=vmem, size = 0x2000, scoped, tag = 'input window, operand 0']
    #allocation3 [shape = 's32[2]{0}', space=sflag, size = 0x8, scoped, tag = 'scoped memory for tpu_custom_call.1']
    #allocation4 [shape = 'u8[2048]{0}', space=vmem, size = 0x800, scoped, tag = 'input window, operand 1, single buffered']
    #allocation5 [shape = 's32[1]{0}', space=sflag, size = 0x4, scoped, tag = 'scoped memory for tpu_custom_call.1']
    %7 = vsyncpa [#allocation3], 0
    %s8 = scalar_lea.sflag [#allocation3], 1
    %9 = vsyncpa %s8, 0
    %10 = vsyncpa [#allocation5], 0
    loop: start=0, step=1, limit=4
    $region2: #{tpu_custom_call.1} parent=1 // loop_pre_header
      _
    $region3: #{tpu_custom_call.1} parent=1 // loop_header
      %s12 = sphi 0, %s16
      %p13 = scmp.ge.s32.totalorder %s12, 4
      %s22 = sphi 0, %s24
      %s25 = sphi 0, %s22
      %s26 = sphi 0, %s25
      %s42 = sphi 0, %s26
      %s46 = sphi 0, %s46
      %s48 = sphi 0, %s46
      %s49 = sphi 0, %s48
      %s63 = sphi 0, %s49
      %s69 = sphi 0, %s71
      %s72 = sphi 0, %s69
      %s73 = sphi 0, %s72
      %s89 = sphi 0, %s73
    $region4: #{tpu_custom_call.1} parent=1 // loop_header_branch
      %15 = sbr.rel (%p13) target = $region8
    $region5: #{tpu_custom_call.1} parent=1 // loop_body
      %s17 = ssub.s32 %s12, 1
      %s18 = ssub.s32 %s12, 2
      %s19 = sadd.s32 %s12, 1
      %s20 = ssub.s32 %s12, %s19
      %p21 = scmp.eq.s32.totalorder %s20, 0
      %s23 = sadd.s32 %s22, 1
      %s24 = scalar_select %p21, %s22, %s23
      %p27 = pneg %p21
      %p28 = scmp.eq.s32.totalorder %s12, 1
      %p29 = por %p27, %p28
      %p30 = scmp.ne.s32.totalorder %s22, %s25
      %p31 = scmp.eq.s32.totalorder %s12, 0
      %p32 = por %p30, %p31
      %p33 = scmp.ne.s32.totalorder %s22, %s25
      %p34 = scmp.eq.s32.totalorder %s17, 1
      %p35 = por %p33, %p34
      %p36 = scmp.ne.s32.totalorder %s25, %s26
      %p37 = scmp.eq.s32.totalorder %s17, 0
      %p38 = por %p36, %p37
      %p39 = scmp.ne.s32.totalorder %s25, %s26
      %p40 = scmp.eq.s32.totalorder %s18, 1
      %p41 = por %p39, %p40
      %p43 = scmp.ne.s32.totalorder %s26, %s42
      %p44 = scmp.eq.s32.totalorder %s18, 0
      %p45 = por %p43, %p44
      %s47 = sadd.s32 %s46, 1
      %p50 = scmp.eq.s32.totalorder %s12, 1
      %p51 = scmp.ne.s32.totalorder %s46, %s48
      %p52 = scmp.eq.s32.totalorder %s12, 0
      %p53 = por %p51, %p52
      %p54 = scmp.ne.s32.totalorder %s46, %s48
      %p55 = scmp.eq.s32.totalorder %s17, 1
      %p56 = por %p54, %p55
      %p57 = scmp.ne.s32.totalorder %s48, %s49
      %p58 = scmp.eq.s32.totalorder %s17, 0
      %p59 = por %p57, %p58
      %p60 = scmp.ne.s32.totalorder %s48, %s49
      %p61 = scmp.eq.s32.totalorder %s18, 1
      %p62 = por %p60, %p61
      %p64 = scmp.ne.s32.totalorder %s49, %s63
      %p65 = scmp.eq.s32.totalorder %s18, 0
      %p66 = por %p64, %p65
      %s67 = ssub.s32 %s12, %s19
      %p68 = scmp.eq.s32.totalorder %s67, 0
      %s70 = sadd.s32 %s69, 1
      %s71 = scalar_select %p68, %s69, %s70
      %p74 = pneg %p68
      %p75 = scmp.eq.s32.totalorder %s12, 1
      %p76 = por %p74, %p75
      %p77 = scmp.ne.s32.totalorder %s69, %s72
      %p78 = scmp.eq.s32.totalorder %s12, 0
      %p79 = por %p77, %p78
      %p80 = scmp.ne.s32.totalorder %s69, %s72
      %p81 = scmp.eq.s32.totalorder %s17, 1
      %p82 = por %p80, %p81
      %p83 = scmp.ne.s32.totalorder %s72, %s73
      %p84 = scmp.eq.s32.totalorder %s17, 0
      %p85 = por %p83, %p84
      %p86 = scmp.ne.s32.totalorder %s72, %s73
      %p87 = scmp.eq.s32.totalorder %s18, 1
      %p88 = por %p86, %p87
      %p90 = scmp.ne.s32.totalorder %s73, %s89
      %p91 = scmp.eq.s32.totalorder %s18, 0
      %p92 = por %p90, %p91
      %p93 = scmp.le.s32.totalorder 1, %s12
      %p94 = scmp.lt.s32.totalorder %s12, 3
      %p95 = pnand %p93, %p94
      %p96 = pneg %p95
      // Predicated region
      $region9: #{tpu_custom_call.1} parent=5 // pred_check
        _
      $region10: #{tpu_custom_call.1} parent=5 // pred_check_branch
        %98 = sbr.rel (%p95) target = $region12
      $region11: #{tpu_custom_call.1} parent=5 // pred_region
        %s99 = ssub.s32 %s12, 1
        // Predicated region
        $region13: #{tpu_custom_call.1} parent=11 // pred_check
          %p100 = pneg %p59
        $region14: #{tpu_custom_call.1} parent=11 // pred_check_branch
          %102 = sbr.rel (%p100) target = $region16
        $region15: #{tpu_custom_call.1} parent=11 // pred_region
          %104 = vsyncadd [#allocation5], 0
          %s106 = sshll.u32 %s1, 4
          %s107 = int_to_ptr.hbm [resolvable:$true] %s106
          %s108 = sshll.u32 [#allocation4], 4
          %s109 = int_to_ptr.vmem [resolvable:$true] %s108
          %111 = dma.hbm_to_vmem [thread:$0]  %s107, 64, %s109, [#allocation5]
        $region16: #{tpu_custom_call.1} parent=11 // pred_fallthru
          _
      $region12: #{tpu_custom_call.1} parent=5 // pred_fallthru
        _
      %p112 = scmp.lt.s32.totalorder %s12, 2
      // Predicated region
      $region17: #{tpu_custom_call.1} parent=5 // pred_check
        %p113 = pneg %p112
      $region18: #{tpu_custom_call.1} parent=5 // pred_check_branch
        %115 = sbr.rel (%p113) target = $region20
      $region19: #{tpu_custom_call.1} parent=5 // pred_region
        // Predicated region
        $region21: #{tpu_custom_call.1} parent=19 // pred_check
          %p116 = pneg %p32
        $region22: #{tpu_custom_call.1} parent=19 // pred_check_branch
          %118 = sbr.rel (%p116) target = $region24
        $region23: #{tpu_custom_call.1} parent=19 // pred_region
          %s119 = sand.u32 %s22, 1
          %s120 = scalar_lea.sflag [#allocation3], %s119
          %s121 = sand.u32 %s22, 1
          %s122 = smul.addr %s121, 8
          %s123 = scalar_lea.vmem [#allocation2], %s122
          %125 = vsyncadd %s120, 0
          %s126 = smul.addr %s12, 8
          %s127 = scalar_lea.hbm %s0, %s126
          %s129 = sshll.u32 %s127, 4
          %s130 = int_to_ptr.hbm [resolvable:$true] %s129
          %s131 = sshll.u32 %s123, 4
          %s132 = int_to_ptr.vmem [resolvable:$true] %s131
          %134 = dma.hbm_to_vmem [thread:$0]  %s130, 128, %s132, %s120
        $region24: #{tpu_custom_call.1} parent=19 // pred_fallthru
          _
      $region20: #{tpu_custom_call.1} parent=5 // pred_fallthru
        _
      %p135 = scmp.le.s32.totalorder 1, %s12
      %p136 = scmp.lt.s32.totalorder %s12, 3
      %p137 = pnand %p135, %p136
      %p138 = pneg %p137
      // Predicated region
      $region25: #{tpu_custom_call.1} parent=5 // pred_check
        _
      $region26: #{tpu_custom_call.1} parent=5 // pred_check_branch
        %140 = sbr.rel (%p137) target = $region28
      $region27: #{tpu_custom_call.1} parent=5 // pred_region
        %s141 = ssub.s32 %s12, 1
        %s142 = sand.u32 %s25, 1
        %s143 = scalar_lea.sflag [#allocation3], %s142
        %s144 = sand.u32 %s25, 1
        %s145 = smul.addr %s144, 8
        %s146 = scalar_lea.vmem [#allocation2], %s145
        // Predicated region
        $region29: #{tpu_custom_call.1} parent=27 // pred_check
          %p147 = pneg %p38
        $region30: #{tpu_custom_call.1} parent=27 // pred_check_branch
          %149 = sbr.rel (%p147) target = $region32
        $region31: #{tpu_custom_call.1} parent=27 // pred_region
          %151 = dma.done %s143, 128
        $region32: #{tpu_custom_call.1} parent=27 // pred_fallthru
          _
        // Predicated region
        $region33: #{tpu_custom_call.1} parent=27 // pred_check
          %p152 = pneg %p59
        $region34: #{tpu_custom_call.1} parent=27 // pred_check_branch
          %154 = sbr.rel (%p152) target = $region36
        $region35: #{tpu_custom_call.1} parent=27 // pred_region
          %156 = dma.done [#allocation5], 64
        $region36: #{tpu_custom_call.1} parent=27 // pred_fallthru
          _
        %s157 = sand.u32 %s25, 1
        %s158 = scalar_lea.sflag [#allocation3], %s157
        %s159 = sand.u32 %s25, 1
        %s160 = smul.addr %s159, 8
        %s161 = scalar_lea.vmem [#allocation2], %s160
        %p162 = pneg %p38
        %p163 = pneg %p35
        %p164 = pneg %p59
        %p165 = pneg %p56
        %p166 = pneg %p85
        %p167 = pneg %p82
        %p168 = scmp.lt.s32.totalorder %s17, 1
        %s169 = scalar_select %p168, %s17, 1
        %s170 = smul.addr %s169, 8
        %s171 = scalar_lea.vmem %s2, %s170
        %p172 = scmp.lt.s32.totalorder %s17, 1
        %s173 = scalar_select %p172, %s17, 1
        %s174 = smul.addr %s173, 8
        %s175 = scalar_lea.vmem %s2, %s174
        %v176 = vld [vmem:[%s146] sm:$0xff]
        %vm177 = vcmask 261120
        %v178 = vsel %vm177, %v176, 0.0
        %179 = vadd.xlane.f32.xlu0 %v178
        %v180 = vpop.xlane.xlu0 %179
        %v181 = vrcp.pop 32.0
        %v182 = vmul.f32 32.0, %v181
        %v183 = vsub.f32 1.0, %v182
        %v184 = vmul.f32 %v181, %v183
        %v185 = vadd.f32 %v181, %v184
        %vm186 = vweird.f32 %v181
        %v187 = vsel %vm186, %v181, %v185
        %v188 = vmul.f32 %v180, %v187
        %v189 = vsub.f32 0.0, %v188
        %v190 = vmul.f32 %v189, 1.442695
        %v191 = vpow.pop %v190
        %v192 = vadd.f32 %v191, 1.0
        %v193 = vrcp.pop %v192
        %v194 = vmul.f32 %v192, %v193
        %v195 = vsub.f32 1.0, %v194
        %v196 = vmul.f32 %v193, %v195
        %v197 = vadd.f32 %v193, %v196
        %vm198 = vweird.f32 %v192
        %vm199 = vweird.f32 %v193
        %vm200 = vmor %vm198, %vm199
        %v201 = vsel %vm200, %v193, %v197
        %v202 = vand.u32 2147483647, %v192
        %vm203 = vcmp.eq.f32.partialorder %v202, 8.507059e+37
        %v204 = vand.u32 %v192, 2147483648
        %v205 = vor.u32 1.1754944e-38, %v204
        %v206 = vsel %vm203, %v205, %v201
        %v207 = vmul.f32 1.0, %v206
        %v208 = vld [vmem:[#allocation4] sm:$0x7]
        %v209 = vperm.slane %v208, 0
        %vm210 = vcmp.ge.f32.partialorder %v207, %v209
        %v211 = vperm.slane %v208, 1
        %vm212 = vcmp.lt.f32.partialorder %v207, %v211
        %vm213 = vmand %vm210, %vm212
        %v214 = vperm.slane %v208, 2
        %v215 = vsel %vm213, %v214, 0.0
        %216 = vadd.xlane.f32.xlu0 %v215
        %v217 = vpop.xlane.xlu0 %216
        %v218 = vmul.f32 %v207, %v217
        %v219 = vmax.f32 %v218, 0.0
        %v220 = vmin.f32 %v219, 1.0
        %vm221 = vcmask 7168
        %222 = vst.msk [vmem:[%s175] sm:$0xff] %vm221, %v220
        %p223 = scmp.lt.s32.totalorder %s17, 1
        %s224 = scalar_select %p223, %s17, 1
        %s225 = smul.addr %s224, 8
        %s226 = scalar_lea.vmem %s2, %s225
        // Predicated region
        $region37: #{tpu_custom_call.1} parent=27 // pred_check
          %p227 = pneg %p82
        $region38: #{tpu_custom_call.1} parent=27 // pred_check_branch
          %229 = sbr.rel (%p227) target = $region40
        $region39: #{tpu_custom_call.1} parent=27 // pred_region
          _
        $region40: #{tpu_custom_call.1} parent=27 // pred_fallthru
          _
      $region28: #{tpu_custom_call.1} parent=5 // pred_fallthru
        _
      %p230 = scmp.le.s32.totalorder 2, %s12
      // Predicated region
      $region41: #{tpu_custom_call.1} parent=5 // pred_check
        %p231 = pneg %p230
      $region42: #{tpu_custom_call.1} parent=5 // pred_check_branch
        %233 = sbr.rel (%p231) target = $region44
      $region43: #{tpu_custom_call.1} parent=5 // pred_region
        %s234 = ssub.s32 %s12, 2
        // Predicated region
        $region45: #{tpu_custom_call.1} parent=43 // pred_check
          %p235 = pneg %p88
        $region46: #{tpu_custom_call.1} parent=43 // pred_check_branch
          %237 = sbr.rel (%p235) target = $region48
        $region47: #{tpu_custom_call.1} parent=43 // pred_region
          %p238 = scmp.lt.s32.totalorder %s18, 1
          %s239 = scalar_select %p238, %s18, 1
          %s240 = smul.addr %s239, 8
          %s241 = scalar_lea.vmem %s2, %s240
        $region48: #{tpu_custom_call.1} parent=43 // pred_fallthru
          _
      $region44: #{tpu_custom_call.1} parent=5 // pred_fallthru
        _
    $region6: #{tpu_custom_call.1} parent=1 // loop_footer
      %s16 = sadd.s32 1, %s12
    $region7: #{tpu_custom_call.1} parent=1 // loop_footer_branch
      %11 = sbr.rel target = $region3
    $region8: #{tpu_custom_call.1} parent=1 // loop_exit
      _
    %242 = vsyncpa [#allocation3], 1
    %s243 = scalar_lea.sflag [#allocation3], 1
    %244 = vsyncpa %s243, 1
    %245 = vsyncpa [#allocation5], 1

</llo_original>
